<compile_context>
chip_gen: v7x
topology: tpu7x:2x2x1
jax: 0.10.0
libtpu: 0.0.40
codegen_flags: <defaults>
</compile_context>

<pallas_src>
import jax
import jax.numpy as jnp
from jax.experimental import pallas as pl
from jax.experimental.pallas import tpu as pltpu

HIGHEST = jax.lax.Precision.HIGHEST  # used only for the offline folds / reference


# ----------------------------------------------------------------------------- kernel
def pose_encoder_kernel(z_ref, wl_ref, w1_ref, b1_ref, w2_ref, b2_ref, y_ref):
    f32 = jnp.float32

    # fused latent path + folded coordinate bias:  h = [z, 1] @ [wl_fused; h_bias]
    h = jnp.dot(z_ref[...], wl_ref[...], preferred_element_type=f32)

    # SiLU -> Linear(h_dim, hidden_pad) -> SiLU -> Linear(hidden_pad, n_out)
    a0 = h * jax.nn.sigmoid(h)
    h1 = jnp.dot(a0, w1_ref[...], preferred_element_type=f32) + b1_ref[...]
    a1 = h1 * jax.nn.sigmoid(h1)
    y = jnp.dot(a1, w2_ref[...], preferred_element_type=f32) + b2_ref[...]

    y_ref[...] = y.astype(y_ref.dtype)


# ----------------------------------------------------------------------------- wrapper
def pose_encoder_forward(z, kernel_params):
    """Full forward pass in one single-shot Pallas kernel (everything fits VMEM)."""
    wl_aug, w1_pad, b1_pad, w2_pad, b2 = kernel_params
    b = z.shape[0]
    n_out = w2_pad.shape[1]

    # append the constant-1.0 column that pairs with the folded h_bias row of wl_aug
    z_aug = jnp.concatenate([z, jnp.ones((b, 1), z.dtype)], axis=1)

    # pad batch to a multiple of 8 rows (f32 sublane tile) -> unmasked stores
    b_pad = max(8, ((b + 7) // 8) * 8)
    if b_pad != b:
        z_aug = jnp.pad(z_aug, ((0, b_pad - b), (0, 0)))

    inputs = (z_aug, wl_aug, w1_pad, b1_pad, w2_pad, b2)
    vmem = pltpu.MemorySpace.VMEM

    y = pl.pallas_call(
        pose_encoder_kernel,
        out_shape=jax.ShapeDtypeStruct((b_pad, n_out), jnp.float32),
        in_specs=[pl.BlockSpec(memory_space=vmem) for _ in inputs],
        out_specs=pl.BlockSpec(memory_space=vmem),
    )(*inputs)

    return y[:b]


# ----------------------------------------------------------------------------- params
def make_params(key, *, num_classes=2, num_channels=4, n=8, m=8, hidden_dim=32):
    """Deterministic synthetic parameters mirroring the PyTorch module shapes."""
    POSE_DIM, LHW_DIM, FILL_FACTOR_DIM = 4, 3, 1
    latent_dim = POSE_DIM + LHW_DIM + FILL_FACTOR_DIM + num_classes
    num_coords = n * m
    in_dim = 2
    feat_size = 4
    x_dim = in_dim * num_coords          # coord_linear in_features
    h_dim = num_coords * feat_size       # coord_linear out_features
    n_out = num_channels * n * m

    def linear_init(k, fan_in, fan_out, bias=True):
        kw, kb = jax.random.split(k)
        bound = 1.0 / jnp.sqrt(jnp.float32(fan_in))
        w = jax.random.uniform(kw, (fan_in, fan_out), jnp.float32, -bound, bound)
        if not bias:
            return w, None
        bvec = jax.random.uniform(kb, (1, fan_out), jnp.float32, -bound, bound)
        return w, bvec

    k_c, k_l, k_1, k_2 = jax.random.split(key, 4)
    wc_t, bc = linear_init(k_c, x_dim, h_dim)                       # coord_linear
    wl_t, _ = linear_init(k_l, latent_dim, feat_size, bias=False)   # latent_linear
    w1_t, b1 = linear_init(k_1, h_dim, hidden_dim)                  # layers[1]
    w2_t, b2 = linear_init(k_2, hidden_dim, n_out)                  # layers[3]

    # fixed coordinate grid, exactly as the PyTorch __init__ builds it
    xgrid = jnp.linspace(-1.0, 1.0, m)
    ygrid = jnp.linspace(1.0, -1.0, n)
    x0, x1 = jnp.meshgrid(xgrid, ygrid)                             # 'xy' indexing
    x_coord = jnp.stack([x0.ravel(), x1.ravel()], axis=1).astype(jnp.float32)
    x_flat = x_coord.reshape(1, num_coords * in_dim)                # (1, x_dim)

    raw = dict(x_flat=x_flat, wc_t=wc_t, bc=bc, wl_t=wl_t,
               w1_t=w1_t, b1=b1, w2_t=w2_t, b2=b2)
    dims = dict(latent_dim=latent_dim, n_out=n_out, h_dim=h_dim,
                feat_size=feat_size, num_coords=num_coords, hidden_dim=hidden_dim)
    return raw, dims


def fuse_params(raw, dims):
    """Offline algebraic folds + lane padding (done once, outside the hot path)."""
    feat, num_coords = dims["feat_size"], dims["num_coords"]

    # constant coordinate path: batch-independent bias (1, h_dim)
    h_bias = jnp.dot(raw["x_flat"], raw["wc_t"], precision=HIGHEST) + raw["bc"]

    # repeat matrix R[f, c*feat + f] = 1 implements expand-over-coords + reshape
    r_mat = jnp.tile(jnp.eye(feat, dtype=jnp.float32), (1, num_coords))  # (feat, h_dim)
    wl_fused = jnp.dot(raw["wl_t"], r_mat, precision=HIGHEST)            # (latent, h_dim)

    # fold h_bias in as an extra row; the wrapper appends a constant-1 column to z
    wl_aug = jnp.concatenate([wl_fused, h_bias], axis=0)                 # (latent+1, h_dim)

    # zero-pad the hidden width to a 128-lane multiple: padded channels are exactly
    # inert (b1 pad = 0 -> silu(0)=0, W2 padded rows = 0 -> no contribution)
    hidden = raw["w1_t"].shape[1]
    hidden_pad = max(128, ((hidden + 127) // 128) * 128)
    pad = hidden_pad - hidden
    w1_pad = jnp.pad(raw["w1_t"], ((0, 0), (0, pad)))                    # (h_dim, 128)
    b1_pad = jnp.pad(raw["b1"], ((0, 0), (0, pad)))                      # (1, 128)
    w2_pad = jnp.pad(raw["w2_t"], ((0, pad), (0, 0)))                    # (128, n_out)

    return (wl_aug, w1_pad, b1_pad, w2_pad, raw["b2"])


# ----------------------------------------------------------------------------- reference
def reference_forward(z, raw, dims):
    """Pure-JAX reference following the PyTorch forward exactly (full precision)."""
    b = z.shape[0]
    h_x = jnp.dot(raw["x_flat"], raw["wc_t"], precision=HIGHEST) + raw["bc"]
    h_z = jnp.dot(z, raw["wl_t"], precision=HIGHEST)                    # (b, feat)
    h_z_rep = jnp.broadcast_to(
        h_z[:, None, :], (b, dims["num_coords"], dims["feat_size"])
    ).reshape(b, dims["h_dim"])
    h = h_x + h_z_rep
    a0 = jax.nn.silu(h)
    a1 = jax.nn.silu(jnp.dot(a0, raw["w1_t"], precision=HIGHEST) + raw["b1"])
    return jnp.dot(a1, raw["w2_t"], precision=HIGHEST) + raw["b2"]


# ----------------------------------------------------------------------------- main
if __name__ == "__main__":
    key = jax.random.PRNGKey(0)
    k_params, k_z = jax.random.split(key)

    # small config: num_classes=2, num_channels=4, n=m=8, hidden=32 -> z_dim=10, n_out=256
    raw, dims = make_params(k_params, num_classes=2, num_channels=4, n=8, m=8,
                            hidden_dim=32)
    kernel_params = fuse_params(raw, dims)

    batch = 2
    z = jax.random.normal(k_z, (batch, dims["latent_dim"]), jnp.float32)

    y = pose_encoder_forward(z, kernel_params)
    y = jax.block_until_ready(y)

    assert y.shape == (batch, dims["n_out"]), y.shape
    assert bool(jnp.all(jnp.isfinite(y)))

    # reference is full-precision; kernel uses single-pass MXU (bf16 inputs, f32 accum),
    # so compare with an MXU-appropriate tolerance.
    y_ref = reference_forward(z, raw, dims)
    max_err = float(jnp.max(jnp.abs(y - y_ref)))
    assert bool(jnp.allclose(y, y_ref, rtol=1e-2, atol=1e-2)), max_err

    print("KERNEL_OK")
</pallas_src>

<mosaic_0001>
module attributes {stable_mosaic.version = 11 : i64} {
  func.func @pose_encoder_kernel(%arg0: memref<8x11xf32, #tpu.memory_space<vmem>>, %arg1: memref<11x256xf32, #tpu.memory_space<vmem>>, %arg2: memref<256x128xf32, #tpu.memory_space<vmem>>, %arg3: memref<1x128xf32, #tpu.memory_space<vmem>>, %arg4: memref<128x256xf32, #tpu.memory_space<vmem>>, %arg5: memref<1x256xf32, #tpu.memory_space<vmem>>, %arg6: memref<8x256xf32, #tpu.memory_space<vmem>>) attributes {dimension_semantics = [], scalar_prefetch = 0 : i64, scratch_operands = 0 : i64, tpu.core_type = #tpu.core_type<tc>} {
    %c0 = arith.constant 0 : index
    %c0_0 = arith.constant 0 : index
    %0 = vector.load %arg0[%c0, %c0_0] : memref<8x11xf32, #tpu.memory_space<vmem>>, vector<8x11xf32>
    %c0_1 = arith.constant 0 : index
    %c0_2 = arith.constant 0 : index
    %1 = vector.load %arg1[%c0_1, %c0_2] : memref<11x256xf32, #tpu.memory_space<vmem>>, vector<11x256xf32>
    %cst = arith.constant dense<0.000000e+00> : vector<8x256xf32>
    %2 = tpu.matmul %0, %1, %cst {dimension_numbers = #tpu.dot_dimension_numbers<[1], [0], [0], [1], [0, 0, 1, 1], [], []>} : vector<8x11xf32>, vector<11x256xf32>, vector<8x256xf32> -> vector<8x256xf32>
    %3 = arith.negf %2 : vector<8x256xf32>
    %4 = math.exp %3 : vector<8x256xf32>
    %cst_3 = arith.constant 1.000000e+00 : f32
    %5 = vector.broadcast %cst_3 : f32 to vector<8x256xf32>
    %6 = arith.addf %5, %4 : vector<8x256xf32>
    %7 = arith.divf %5, %6 : vector<8x256xf32>
    %8 = arith.mulf %2, %7 : vector<8x256xf32>
    %c0_4 = arith.constant 0 : index
    %c0_5 = arith.constant 0 : index
    %9 = vector.load %arg2[%c0_4, %c0_5] : memref<256x128xf32, #tpu.memory_space<vmem>>, vector<256x128xf32>
    %cst_6 = arith.constant dense<0.000000e+00> : vector<8x128xf32>
    %10 = tpu.matmul %8, %9, %cst_6 {dimension_numbers = #tpu.dot_dimension_numbers<[1], [0], [0], [1], [0, 0, 1, 1], [], []>} : vector<8x256xf32>, vector<256x128xf32>, vector<8x128xf32> -> vector<8x128xf32>
    %c0_7 = arith.constant 0 : index
    %c0_8 = arith.constant 0 : index
    %11 = vector.load %arg3[%c0_7, %c0_8] : memref<1x128xf32, #tpu.memory_space<vmem>>, vector<1x128xf32>
    %12 = vector.broadcast %11 : vector<1x128xf32> to vector<8x128xf32>
    %13 = arith.addf %10, %12 : vector<8x128xf32>
    %14 = arith.negf %13 : vector<8x128xf32>
    %15 = math.exp %14 : vector<8x128xf32>
    %cst_9 = arith.constant 1.000000e+00 : f32
    %16 = vector.broadcast %cst_9 : f32 to vector<8x128xf32>
    %17 = arith.addf %16, %15 : vector<8x128xf32>
    %18 = arith.divf %16, %17 : vector<8x128xf32>
    %19 = arith.mulf %13, %18 : vector<8x128xf32>
    %c0_10 = arith.constant 0 : index
    %c0_11 = arith.constant 0 : index
    %20 = vector.load %arg4[%c0_10, %c0_11] : memref<128x256xf32, #tpu.memory_space<vmem>>, vector<128x256xf32>
    %cst_12 = arith.constant dense<0.000000e+00> : vector<8x256xf32>
    %21 = tpu.matmul %19, %20, %cst_12 {dimension_numbers = #tpu.dot_dimension_numbers<[1], [0], [0], [1], [0, 0, 1, 1], [], []>} : vector<8x128xf32>, vector<128x256xf32>, vector<8x256xf32> -> vector<8x256xf32>
    %c0_13 = arith.constant 0 : index
    %c0_14 = arith.constant 0 : index
    %22 = vector.load %arg5[%c0_13, %c0_14] : memref<1x256xf32, #tpu.memory_space<vmem>>, vector<1x256xf32>
    %23 = vector.broadcast %22 : vector<1x256xf32> to vector<8x256xf32>
    %24 = arith.addf %21, %23 : vector<8x256xf32>
    %c0_15 = arith.constant 0 : index
    %c0_16 = arith.constant 0 : index
    %25 = vector.load %arg6[%c0_15, %c0_16] : memref<8x256xf32, #tpu.memory_space<vmem>>, vector<8x256xf32>
    tpu.vector_store %arg6[%c0_15, %c0_16], %24 {strides = array<i32>} : memref<8x256xf32, #tpu.memory_space<vmem>>, vector<8x256xf32>,
    return
  }
}

</mosaic_0001>

<llo_original>
// kernel: tpu_custom_call.1
$region0: #{tpu_custom_call.1}
  #allocation0 [shape = 'u32[]', space=smem, size = 0x4, offset = 0x4, fixed_abs, tag = 'smem constant byte address 0x4 - core index']
  #allocation1 [shape = 'u32[144,128]{1,0:T(1,128)}', space=vmem, size = 0x12000, scoped, tag = 'internal scratch']
  %s0 = inlined_call_operand.hbm [shape: f32[8,11], index: 0, kind: input, shape index: {}]
  %s1 = inlined_call_operand.hbm [shape: f32[11,256], index: 1, kind: input, shape index: {}]
  %s2 = inlined_call_operand.hbm [shape: f32[256,128], index: 2, kind: input, shape index: {}]
  %s3 = inlined_call_operand.vmem [shape: f32[1,128], index: 3, kind: input, shape index: {}]
  %s4 = inlined_call_operand.hbm [shape: f32[128,256], index: 4, kind: input, shape index: {}]
  %s5 = inlined_call_operand.vmem [shape: f32[1,256], index: 5, kind: input, shape index: {}]
  %s6 = inlined_call_operand.hbm [shape: f32[8,256], index: 6, kind: output, shape index: {}]
  %s7 = sld [smem:[#allocation0]]
  $region50: #{tpu_custom_call.1} parent=0
    _
  %s9 = ssub.s32 1, %s7
  %s10 = scalar_select 0, %s9, %s7
  $region1: #{tpu_custom_call.1} parent=0
    #allocation2 [shape = 'u8[4096]{0}', space=vmem, size = 0x1000, scoped, tag = 'input window, operand 0, single buffered']
    #allocation3 [shape = 's32[1]{0}', space=sflag, size = 0x4, scoped, tag = 'scoped memory for tpu_custom_call.1']
    #allocation4 [shape = 's32[1]{0}', space=sflag, size = 0x4, scoped, tag = 'scoped memory for tpu_custom_call.1']
    #allocation5 [shape = 'u8[16384]{0}', space=vmem, size = 0x4000, scoped, tag = 'input window, operand 1, single buffered']
    #allocation6 [shape = 's32[1]{0}', space=sflag, size = 0x4, scoped, tag = 'scoped memory for tpu_custom_call.1']
    #allocation7 [shape = 'u8[131072]{0}', space=vmem, size = 0x20000, scoped, tag = 'input window, operand 2, single buffered']
    #allocation8 [shape = 'u8[131072]{0}', space=vmem, size = 0x20000, scoped, tag = 'input window, operand 4, single buffered']
    #allocation9 [shape = 's32[1]{0}', space=sflag, size = 0x4, scoped, tag = 'scoped memory for tpu_custom_call.1']
    #allocation10 [shape = 'u8[8192]{0}', space=vmem, size = 0x2000, scoped, tag = 'output window, operand 0, single buffered']
    %11 = vsyncpa [#allocation3], 0
    %12 = vsyncpa [#allocation6], 0
    %13 = vsyncpa [#allocation9], 0
    %14 = vsyncpa [#allocation4], 0
    // Predicated region
    $region2: #{tpu_custom_call.1} parent=1 // pred_check
      _
    $region3: #{tpu_custom_call.1} parent=1 // pred_check_branch
      %16 = sbr.rel (0) target = $region5
    $region4: #{tpu_custom_call.1} parent=1 // pred_region
      %s18 = ssub.s32 128, 128
      %19 = vsyncadd [#allocation3], %s18
      %s21 = sshll.u32 [#allocation2], 4
      %s22 = int_to_ptr.vmem [resolvable:$true] %s21
      %24 = dma.hbm_to_vmem [thread:$0]  %s0, 128, %s22, [#allocation3]
    $region5: #{tpu_custom_call.1} parent=1 // pred_fallthru
      _
    // Predicated region
    $region6: #{tpu_custom_call.1} parent=1 // pred_check
      _
    $region7: #{tpu_custom_call.1} parent=1 // pred_check_branch
      %26 = sbr.rel (0) target = $region9
    $region8: #{tpu_custom_call.1} parent=1 // pred_region
      %s28 = ssub.s32 512, 512
      %29 = vsyncadd [#allocation6], %s28
      %s30 = sshll.u32 [#allocation5], 4
      %s31 = int_to_ptr.vmem [resolvable:$true] %s30
      %36 = dma.hbm_to_vmem [thread:$0]  %s1, 512, %s31, [#allocation6], 256, 256, 16
    $region9: #{tpu_custom_call.1} parent=1 // pred_fallthru
      _
    // Predicated region
    $region10: #{tpu_custom_call.1} parent=1 // pred_check
      _
    $region11: #{tpu_custom_call.1} parent=1 // pred_check_branch
      %38 = sbr.rel (0) target = $region13
    $region12: #{tpu_custom_call.1} parent=1 // pred_region
      %s40 = ssub.s32 4096, 4096
      %41 = vsyncadd [#allocation6], %s40
      %s42 = sshll.u32 [#allocation7], 4
      %s43 = int_to_ptr.vmem [resolvable:$true] %s42
      %48 = dma.hbm_to_vmem [thread:$0]  %s2, 4096, %s43, [#allocation6], 128, 128, 8
    $region13: #{tpu_custom_call.1} parent=1 // pred_fallthru
      _
    // Predicated region
    $region14: #{tpu_custom_call.1} parent=1 // pred_check
      _
    $region15: #{tpu_custom_call.1} parent=1 // pred_check_branch
      %50 = sbr.rel (0) target = $region17
    $region16: #{tpu_custom_call.1} parent=1 // pred_region
      _
    $region17: #{tpu_custom_call.1} parent=1 // pred_fallthru
      _
    // Predicated region
    $region18: #{tpu_custom_call.1} parent=1 // pred_check
      _
    $region19: #{tpu_custom_call.1} parent=1 // pred_check_branch
      %52 = sbr.rel (0) target = $region21
    $region20: #{tpu_custom_call.1} parent=1 // pred_region
      %s54 = ssub.s32 4096, 4096
      %55 = vsyncadd [#allocation9], %s54
      %s56 = sshll.u32 [#allocation8], 4
      %s57 = int_to_ptr.vmem [resolvable:$true] %s56
      %62 = dma.hbm_to_vmem [thread:$0]  %s4, 4096, %s57, [#allocation9], 256, 256, 16
    $region21: #{tpu_custom_call.1} parent=1 // pred_fallthru
      _
    // Predicated region
    $region22: #{tpu_custom_call.1} parent=1 // pred_check
      _
    $region23: #{tpu_custom_call.1} parent=1 // pred_check_branch
      %64 = sbr.rel (0) target = $region25
    $region24: #{tpu_custom_call.1} parent=1 // pred_region
      _
    $region25: #{tpu_custom_call.1} parent=1 // pred_fallthru
      _
    // Predicated region
    $region26: #{tpu_custom_call.1} parent=1 // pred_check
      _
    $region27: #{tpu_custom_call.1} parent=1 // pred_check_branch
      %66 = sbr.rel (0) target = $region29
    $region28: #{tpu_custom_call.1} parent=1 // pred_region
      %67 = dma.done [#allocation3], 128
    $region29: #{tpu_custom_call.1} parent=1 // pred_fallthru
      _
    // Predicated region
    $region30: #{tpu_custom_call.1} parent=1 // pred_check
      _
    $region31: #{tpu_custom_call.1} parent=1 // pred_check_branch
      %69 = sbr.rel (0) target = $region33
    $region32: #{tpu_custom_call.1} parent=1 // pred_region
      %70 = dma.done [#allocation6], 512
    $region33: #{tpu_custom_call.1} parent=1 // pred_fallthru
      _
    // Predicated region
    $region34: #{tpu_custom_call.1} parent=1 // pred_check
      _
    $region35: #{tpu_custom_call.1} parent=1 // pred_check_branch
      %72 = sbr.rel (0) target = $region37
    $region36: #{tpu_custom_call.1} parent=1 // pred_region
      %73 = dma.done [#allocation6], 4096
    $region37: #{tpu_custom_call.1} parent=1 // pred_fallthru
      _
    // Predicated region
    $region38: #{tpu_custom_call.1} parent=1 // pred_check
      _
    $region39: #{tpu_custom_call.1} parent=1 // pred_check_branch
      %75 = sbr.rel (0) target = $region41
    $region40: #{tpu_custom_call.1} parent=1 // pred_region
      %76 = dma.done [#allocation9], 4096
    $region41: #{tpu_custom_call.1} parent=1 // pred_fallthru
      _
    %v77 = vld [vmem:[#allocation2] sm:$0xff]
    %v78 = vld [vmem:[#allocation5] sm:$0xff]
    %v79 = vld [vmem:[#allocation5 + $0x8] sm:$0xff]
    %v80 = vld [vmem:[#allocation5 + $0x10] sm:$0x7]
    %v81 = vld [vmem:[#allocation5 + $0x18] sm:$0x7]
    %vm82 = vcmask 89088
    %v84 = vsel %vm82, %v77, 0
    %vm86 = vcmask 1042432
    %v88 = vsel %vm86, %v80, 0
    %v91 = vsel %vm86, %v81, 0
    %93 = vmatprep.subr.mxu0 %v79
    %94 = vmatpush1.msra.mxu0 %v78
    %95 = vmatprep.subr.mxu0 %v91
    %96 = vmatpush1.msra.mxu0 %v88
    %97 = vmatprep.subr.mxu0 0.0
    %98 = vmatpush1.msra.mxu0 0.0
    %99 = vmatprep.subr.mxu0 0.0
    %100 = vmatpush1.msra.mxu0 0.0
    %101 = vmatprep.subr.mxu0 0.0
    %102 = vmatpush1.msra.mxu0 0.0
    %103 = vmatprep.subr.mxu0 0.0
    %104 = vmatpush1.msra.mxu0 0.0
    %105 = vmatprep.subr.mxu0 0.0
    %106 = vmatpush1.msra.mxu0 0.0
    %107 = vmatprep.subr.mxu0 0.0
    %108 = vmatpush1.msra.mxu0 0.0
    %109 = vmatprep.subr.mxu0 0.0
    %110 = vmatpush1.msra.mxu0 0.0
    %111 = vmatprep.subr.mxu0 0.0
    %112 = vmatpush1.msra.mxu0 0.0
    %113 = vmatprep.subr.mxu0 0.0
    %114 = vmatpush1.msra.mxu0 0.0
    %115 = vmatprep.subr.mxu0 0.0
    %116 = vmatpush1.msra.mxu0 0.0
    %117 = vmatprep.subr.mxu0 0.0
    %118 = vmatpush1.msra.mxu0 0.0
    %119 = vmatprep.subr.mxu0 0.0
    %120 = vmatpush1.msra.mxu0 0.0
    %121 = vmatprep.subr.mxu0 0.0
    %122 = vmatpush1.msra.mxu0 0.0
    %123 = vmatprep.subr.mxu0 0.0
    %124 = vmatpush1.msra.mxu0 0.0
    %125 = vmatprep.subr.mxu0 0.0
    %126 = vmatpush1.msra.mxu0 0.0
    %127 = vmatprep.subr.mxu0 0.0
    %128 = vmatpush1.msra.mxu0 0.0
    %129 = vmatprep.subr.mxu0 0.0
    %130 = vmatpush1.msra.mxu0 0.0
    %131 = vmatprep.subr.mxu0 0.0
    %132 = vmatpush1.msra.mxu0 0.0
    %133 = vmatprep.subr.mxu0 0.0
    %134 = vmatpush1.msra.mxu0 0.0
    %135 = vmatprep.subr.mxu0 0.0
    %136 = vmatpush1.msra.mxu0 0.0
    %137 = vmatprep.subr.mxu0 0.0
    %138 = vmatpush1.msra.mxu0 0.0
    %139 = vmatprep.subr.mxu0 0.0
    %140 = vmatpush1.msra.mxu0 0.0
    %141 = vmatprep.subr.mxu0 0.0
    %142 = vmatpush1.msra.mxu0 0.0
    %143 = vmatprep.subr.mxu0 0.0
    %144 = vmatpush1.msra.mxu0 0.0
    %145 = vmatprep.subr.mxu0 0.0
    %146 = vmatpush1.msra.mxu0 0.0
    %147 = vmatprep.subr.mxu0 0.0
    %148 = vmatpush1.msra.mxu0 0.0
    %149 = vmatprep.subr.mxu0 0.0
    %150 = vmatpush1.msra.mxu0 0.0
    %151 = vmatprep.subr.mxu0 0.0
    %152 = vmatpush1.msra.mxu0 0.0
    %153 = vmatprep.subr.mxu0 0.0
    %154 = vmatpush1.msra.mxu0 0.0
    %155 = vmatprep.subr.mxu0 0.0
    %156 = vmatpush1.msra.mxu0 0.0
    %157 = vmatprep.mubr.f32.mxu0 0.0
    %158 = vmatmul.mubr.f32.gmra.mrb[0].mxu0 %v84
    %v159 = vpop.f32.mrb[0].mxu0
    %v160 = vadd.f32 0.0, %v159
    %v161 = vpop.f32.mrb[0].mxu0
    %v162 = vadd.f32 0.0, %v161
    %163 = vdwg.mxu0
    %v164 = vxor.u32 %v160, 2147483648
    %v165 = vxor.u32 %v162, 2147483648
    %v166 = vmul.f32 %v164, 1.442695
    %v167 = vpow.pop %v166
    %v168 = vmul.f32 %v165, 1.442695
    %v169 = vpow.pop %v168
    %v170 = vadd.f32 %v167, 1.0
    %v171 = vadd.f32 %v169, 1.0
    %v172 = vrcp.pop %v170
    %v173 = vmul.f32 1.0, %v172
    %v174 = vrcp.pop %v171
    %v175 = vmul.f32 1.0, %v174
    %v176 = vmul.f32 %v160, %v173
    %v177 = vmul.f32 %v162, %v175
    %v178 = vld [vmem:[#allocation7] sm:$0xff]
    %v179 = vld [vmem:[#allocation7 + $0x8] sm:$0xff]
    %v180 = vld [vmem:[#allocation7 + $0x10] sm:$0xff]
    %v181 = vld [vmem:[#allocation7 + $0x18] sm:$0xff]
    %v182 = vld [vmem:[#allocation7 + $0x20] sm:$0xff]
    %v183 = vld [vmem:[#allocation7 + $0x28] sm:$0xff]
    %v184 = vld [vmem:[#allocation7 + $0x30] sm:$0xff]
    %v185 = vld [vmem:[#allocation7 + $0x38] sm:$0xff]
    %v186 = vld [vmem:[#allocation7 + $0x40] sm:$0xff]
    %v187 = vld [vmem:[#allocation7 + $0x48] sm:$0xff]
    %v188 = vld [vmem:[#allocation7 + $0x50] sm:$0xff]
    %v189 = vld [vmem:[#allocation7 + $0x58] sm:$0xff]
    %v190 = vld [vmem:[#allocation7 + $0x60] sm:$0xff]
    %v191 = vld [vmem:[#allocation7 + $0x68] sm:$0xff]
    %v192 = vld [vmem:[#allocation7 + $0x70] sm:$0xff]
    %v193 = vld [vmem:[#allocation7 + $0x78] sm:$0xff]
    %v194 = vld [vmem:[#allocation7 + $0x80] sm:$0xff]
    %v195 = vld [vmem:[#allocation7 + $0x88] sm:$0xff]
    %v196 = vld [vmem:[#allocation7 + $0x90] sm:$0xff]
    %v197 = vld [vmem:[#allocation7 + $0x98] sm:$0xff]
    %v198 = vld [vmem:[#allocation7 + $0xa0] sm:$0xff]
    %v199 = vld [vmem:[#allocation7 + $0xa8] sm:$0xff]
    %v200 = vld [vmem:[#allocation7 + $0xb0] sm:$0xff]
    %v201 = vld [vmem:[#allocation7 + $0xb8] sm:$0xff]
    %v202 = vld [vmem:[#allocation7 + $0xc0] sm:$0xff]
    %v203 = vld [vmem:[#allocation7 + $0xc8] sm:$0xff]
    %v204 = vld [vmem:[#allocation7 + $0xd0] sm:$0xff]
    %v205 = vld [vmem:[#allocation7 + $0xd8] sm:$0xff]
    %v206 = vld [vmem:[#allocation7 + $0xe0] sm:$0xff]
    %v207 = vld [vmem:[#allocation7 + $0xe8] sm:$0xff]
    %v208 = vld [vmem:[#allocation7 + $0xf0] sm:$0xff]
    %v209 = vld [vmem:[#allocation7 + $0xf8] sm:$0xff]
    %v210 = vld [vmem:[%s3] sm:$0x1]
    %v212 = vlaneseq
    %v213 = vshrl.u32 %v212, 7
    %v214 = vsub.s32 0, %v213
    %v215 = vrot.slane %v210, %v214
    %217 = vmatprep.subr.mxu0 0.0
    %218 = vmatpush1.msra.mxu0 %v178
    %219 = vmatprep.subr.mxu0 0.0
    %220 = vmatpush1.msra.mxu0 %v179
    %221 = vmatprep.subr.mxu0 0.0
    %222 = vmatpush1.msra.mxu0 %v180
    %223 = vmatprep.subr.mxu0 0.0
    %224 = vmatpush1.msra.mxu0 %v181
    %225 = vmatprep.subr.mxu0 0.0
    %226 = vmatpush1.msra.mxu0 %v182
    %227 = vmatprep.subr.mxu0 0.0
    %228 = vmatpush1.msra.mxu0 %v183
    %229 = vmatprep.subr.mxu0 0.0
    %230 = vmatpush1.msra.mxu0 %v184
    %231 = vmatprep.subr.mxu0 0.0
    %232 = vmatpush1.msra.mxu0 %v185
    %233 = vmatprep.subr.mxu0 0.0
    %234 = vmatpush1.msra.mxu0 %v186
    %235 = vmatprep.subr.mxu0 0.0
    %236 = vmatpush1.msra.mxu0 %v187
    %237 = vmatprep.subr.mxu0 0.0
    %238 = vmatpush1.msra.mxu0 %v188
    %239 = vmatprep.subr.mxu0 0.0
    %240 = vmatpush1.msra.mxu0 %v189
    %241 = vmatprep.subr.mxu0 0.0
    %242 = vmatpush1.msra.mxu0 %v190
    %243 = vmatprep.subr.mxu0 0.0
    %244 = vmatpush1.msra.mxu0 %v191
    %245 = vmatprep.subr.mxu0 0.0
    %246 = vmatpush1.msra.mxu0 %v192
    %247 = vmatprep.subr.mxu0 0.0
    %248 = vmatpush1.msra.mxu0 %v193
    %249 = vmatprep.subr.mxu0 0.0
    %250 = vmatpush1.msra.mxu0 %v194
    %251 = vmatprep.subr.mxu0 0.0
    %252 = vmatpush1.msra.mxu0 %v195
    %253 = vmatprep.subr.mxu0 0.0
    %254 = vmatpush1.msra.mxu0 %v196
    %255 = vmatprep.subr.mxu0 0.0
    %256 = vmatpush1.msra.mxu0 %v197
    %257 = vmatprep.subr.mxu0 0.0
    %258 = vmatpush1.msra.mxu0 %v198
    %259 = vmatprep.subr.mxu0 0.0
    %260 = vmatpush1.msra.mxu0 %v199
    %261 = vmatprep.subr.mxu0 0.0
    %262 = vmatpush1.msra.mxu0 %v200
    %263 = vmatprep.subr.mxu0 0.0
    %264 = vmatpush1.msra.mxu0 %v201
    %265 = vmatprep.subr.mxu0 0.0
    %266 = vmatpush1.msra.mxu0 %v202
    %267 = vmatprep.subr.mxu0 0.0
    %268 = vmatpush1.msra.mxu0 %v203
    %269 = vmatprep.subr.mxu0 0.0
    %270 = vmatpush1.msra.mxu0 %v204
    %271 = vmatprep.subr.mxu0 0.0
    %272 = vmatpush1.msra.mxu0 %v205
    %273 = vmatprep.subr.mxu0 0.0
    %274 = vmatpush1.msra.mxu0 %v206
    %275 = vmatprep.subr.mxu0 0.0
    %276 = vmatpush1.msra.mxu0 %v207
    %277 = vmatprep.subr.mxu0 0.0
    %278 = vmatpush1.msra.mxu0 %v208
    %279 = vmatprep.subr.mxu0 0.0
    %280 = vmatpush1.msra.mxu0 %v209
    %281 = vmatprep.mubr.f32.mxu0 %v177
    %282 = vmatmul.mubr.f32.gmra.mrb[0].mxu0 %v176
    %v283 = vpop.f32.mrb[0].mxu0
    %v284 = vadd.f32 %v215, %v283
    %v285 = vpop.f32.mrb[0].mxu0
    %286 = vdwg.mxu0
    %v287 = vxor.u32 %v284, 2147483648
    %v288 = vmul.f32 %v287, 1.442695
    %v289 = vpow.pop %v288
    %v290 = vadd.f32 %v289, 1.0
    %v291 = vrcp.pop %v290
    %v292 = vmul.f32 1.0, %v291
    %v293 = vmul.f32 %v284, %v292
    %v294 = vld [vmem:[#allocation8] sm:$0xff]
    %v295 = vld [vmem:[#allocation8 + $0x8] sm:$0xff]
    %v296 = vld [vmem:[#allocation8 + $0x10] sm:$0xff]
    %v297 = vld [vmem:[#allocation8 + $0x18] sm:$0xff]
    %v298 = vld [vmem:[#allocation8 + $0x20] sm:$0xff]
    %v299 = vld [vmem:[#allocation8 + $0x28] sm:$0xff]
    %v300 = vld [vmem:[#allocation8 + $0x30] sm:$0xff]
    %v301 = vld [vmem:[#allocation8 + $0x38] sm:$0xff]
    %v302 = vld [vmem:[#allocation8 + $0x40] sm:$0xff]
    %v303 = vld [vmem:[#allocation8 + $0x48] sm:$0xff]
    %v304 = vld [vmem:[#allocation8 + $0x50] sm:$0xff]
    %v305 = vld [vmem:[#allocation8 + $0x58] sm:$0xff]
    %v306 = vld [vmem:[#allocation8 + $0x60] sm:$0xff]
    %v307 = vld [vmem:[#allocation8 + $0x68] sm:$0xff]
    %v308 = vld [vmem:[#allocation8 + $0x70] sm:$0xff]
    %v309 = vld [vmem:[#allocation8 + $0x78] sm:$0xff]
    %v310 = vld [vmem:[#allocation8 + $0x80] sm:$0xff]
    %v311 = vld [vmem:[#allocation8 + $0x88] sm:$0xff]
    %v312 = vld [vmem:[#allocation8 + $0x90] sm:$0xff]
    %v313 = vld [vmem:[#allocation8 + $0x98] sm:$0xff]
    %v314 = vld [vmem:[#allocation8 + $0xa0] sm:$0xff]
    %v315 = vld [vmem:[#allocation8 + $0xa8] sm:$0xff]
    %v316 = vld [vmem:[#allocation8 + $0xb0] sm:$0xff]
    %v317 = vld [vmem:[#allocation8 + $0xb8] sm:$0xff]
    %v318 = vld [vmem:[#allocation8 + $0xc0] sm:$0xff]
    %v319 = vld [vmem:[#allocation8 + $0xc8] sm:$0xff]
    %v320 = vld [vmem:[#allocation8 + $0xd0] sm:$0xff]
    %v321 = vld [vmem:[#allocation8 + $0xd8] sm:$0xff]
    %v322 = vld [vmem:[#allocation8 + $0xe0] sm:$0xff]
    %v323 = vld [vmem:[#allocation8 + $0xe8] sm:$0xff]
    %v324 = vld [vmem:[#allocation8 + $0xf0] sm:$0xff]
    %v325 = vld [vmem:[#allocation8 + $0xf8] sm:$0xff]
    %v326 = vld [vmem:[%s5] sm:$0x3]
    %v328 = vlaneseq
    %v329 = vshrl.u32 %v328, 7
    %v330 = vsub.s32 0, %v329
    %v331 = vrot.slane %v326, %v330
    %v332 = vlaneseq
    %v333 = vshrl.u32 %v332, 7
    %v334 = vsub.s32 1, %v333
    %v335 = vrot.slane %v326, %v334
    %338 = vmatprep.subr.mxu0 %v295
    %339 = vmatpush1.msra.mxu0 %v294
    %340 = vmatprep.subr.mxu0 %v297
    %341 = vmatpush1.msra.mxu0 %v296
    %342 = vmatprep.subr.mxu0 %v299
    %343 = vmatpush1.msra.mxu0 %v298
    %344 = vmatprep.subr.mxu0 %v301
    %345 = vmatpush1.msra.mxu0 %v300
    %346 = vmatprep.subr.mxu0 %v303
    %347 = vmatpush1.msra.mxu0 %v302
    %348 = vmatprep.subr.mxu0 %v305
    %349 = vmatpush1.msra.mxu0 %v304
    %350 = vmatprep.subr.mxu0 %v307
    %351 = vmatpush1.msra.mxu0 %v306
    %352 = vmatprep.subr.mxu0 %v309
    %353 = vmatpush1.msra.mxu0 %v308
    %354 = vmatprep.subr.mxu0 %v311
    %355 = vmatpush1.msra.mxu0 %v310
    %356 = vmatprep.subr.mxu0 %v313
    %357 = vmatpush1.msra.mxu0 %v312
    %358 = vmatprep.subr.mxu0 %v315
    %359 = vmatpush1.msra.mxu0 %v314
    %360 = vmatprep.subr.mxu0 %v317
    %361 = vmatpush1.msra.mxu0 %v316
    %362 = vmatprep.subr.mxu0 %v319
    %363 = vmatpush1.msra.mxu0 %v318
    %364 = vmatprep.subr.mxu0 %v321
    %365 = vmatpush1.msra.mxu0 %v320
    %366 = vmatprep.subr.mxu0 %v323
    %367 = vmatpush1.msra.mxu0 %v322
    %368 = vmatprep.subr.mxu0 %v325
    %369 = vmatpush1.msra.mxu0 %v324
    %370 = vmatprep.subr.mxu0 0.0
    %371 = vmatpush1.msra.mxu0 0.0
    %372 = vmatprep.subr.mxu0 0.0
    %373 = vmatpush1.msra.mxu0 0.0
    %374 = vmatprep.subr.mxu0 0.0
    %375 = vmatpush1.msra.mxu0 0.0
    %376 = vmatprep.subr.mxu0 0.0
    %377 = vmatpush1.msra.mxu0 0.0
    %378 = vmatprep.subr.mxu0 0.0
    %379 = vmatpush1.msra.mxu0 0.0
    %380 = vmatprep.subr.mxu0 0.0
    %381 = vmatpush1.msra.mxu0 0.0
    %382 = vmatprep.subr.mxu0 0.0
    %383 = vmatpush1.msra.mxu0 0.0
    %384 = vmatprep.subr.mxu0 0.0
    %385 = vmatpush1.msra.mxu0 0.0
    %386 = vmatprep.subr.mxu0 0.0
    %387 = vmatpush1.msra.mxu0 0.0
    %388 = vmatprep.subr.mxu0 0.0
    %389 = vmatpush1.msra.mxu0 0.0
    %390 = vmatprep.subr.mxu0 0.0
    %391 = vmatpush1.msra.mxu0 0.0
    %392 = vmatprep.subr.mxu0 0.0
    %393 = vmatpush1.msra.mxu0 0.0
    %394 = vmatprep.subr.mxu0 0.0
    %395 = vmatpush1.msra.mxu0 0.0
    %396 = vmatprep.subr.mxu0 0.0
    %397 = vmatpush1.msra.mxu0 0.0
    %398 = vmatprep.subr.mxu0 0.0
    %399 = vmatpush1.msra.mxu0 0.0
    %400 = vmatprep.subr.mxu0 0.0
    %401 = vmatpush1.msra.mxu0 0.0
    %402 = vmatprep.mubr.f32.mxu0 0.0
    %403 = vmatmul.mubr.f32.gmra.mrb[0].mxu0 %v293
    %v404 = vpop.f32.mrb[0].mxu0
    %v405 = vadd.f32 %v331, %v404
    %v406 = vpop.f32.mrb[0].mxu0
    %v407 = vadd.f32 %v335, %v406
    %408 = vdwg.mxu0
    %409 = vst [vmem:[#allocation10] sm:$0xff] %v405
    %410 = vst [vmem:[#allocation10 + $0x8] sm:$0xff] %v407
    // Predicated region
    $region42: #{tpu_custom_call.1} parent=1 // pred_check
      _
    $region43: #{tpu_custom_call.1} parent=1 // pred_check_branch
      %412 = sbr.rel (0) target = $region45
    $region44: #{tpu_custom_call.1} parent=1 // pred_region
      %s414 = ssub.s32 256, 256
      %415 = vsyncadd [#allocation4], %s414
      %s417 = sshll.u32 [#allocation10], 4
      %s418 = int_to_ptr.vmem [resolvable:$true] %s417
      %420 = dma.vmem_to_hbm [thread:$0]  %s418, 256, %s6, [#allocation4]
    $region45: #{tpu_custom_call.1} parent=1 // pred_fallthru
      _
    // Predicated region
    $region46: #{tpu_custom_call.1} parent=1 // pred_check
      _
    $region47: #{tpu_custom_call.1} parent=1 // pred_check_branch
      %422 = sbr.rel (0) target = $region49
    $region48: #{tpu_custom_call.1} parent=1 // pred_region
      %423 = dma.done [#allocation4], 256
    $region49: #{tpu_custom_call.1} parent=1 // pred_fallthru
      _
    %424 = vsyncpa [#allocation3], 1
    %425 = vsyncpa [#allocation6], 1
    %426 = vsyncpa [#allocation9], 1
    %427 = vsyncpa [#allocation4], 1

</llo_original>
